<compile_context>
chip_gen: v5e
topology: v5e:2x2
jax: 0.10.0
libtpu: 0.0.40
codegen_flags: <defaults>
</compile_context>

<pallas_src>
import functools

import jax
import jax.numpy as jnp
import numpy as np
from jax.experimental import pallas as pl
from jax.experimental.pallas import tpu as pltpu

BN_EPS = 1e-5


def gcn_block_kernel(x_ref, adjbd_ref, deg_ref,
                     w0_ref, b0_ref, g0_ref, be0_ref,
                     w1_ref, b1_ref, g1_ref, be1_ref,
                     w2_ref, b2_ref, g2_ref, be2_ref,
                     wsc_ref, wg_ref, bg_ref,
                     out_ref, *, batch, n_atom, project_residual, matmul_dtype):
    B, N = batch, n_atom
    BN = B * N

    xf = x_ref[...]              # (B*N, Din)  f32, batch-major rows
    adj_bd = adjbd_ref[...]      # (B*N, B*N)  matmul_dtype, block-diagonal 0/1
    deg = deg_ref[...]           # (B*N, 1)    f32 row degrees

    def mxu(a, b):
        # Single 2-D MXU contraction, f32 accumulation.
        return jnp.dot(a.astype(matmul_dtype), b.astype(matmul_dtype),
                       preferred_element_type=jnp.float32)

    def batch_fold(v):
        # (B*N, 1) -> (N, 1): sum the B batch copies of each atom (static slices).
        acc = v[0:N]
        for b in range(1, B):
            acc = acc + v[b * N:(b + 1) * N]
        return acc

    def batch_tile(v):
        # (N, 1) -> (B*N, 1): replicate per-atom stats back to every row.
        return v if B == 1 else jnp.concatenate([v] * B, axis=0)

    def gcn_layer(h, w_ref, b_ref, g_ref, be_ref, relu):
        w = w_ref[...]
        d_in, d_out = w.shape
        # adj @ (h W + 1 b) == (adj @ h) W + deg b : aggregate on the narrower
        # feature width; one block-diagonal contraction replaces B batched ones.
        if d_in <= d_out:
            y = mxu(mxu(adj_bd, h), w)
        else:
            y = mxu(adj_bd, mxu(h, w))
        y = y + deg * b_ref[...]                       # folded linear bias

        # BatchNorm1d(n_atom): training-mode biased stats over (batch, feature)
        # per atom; two-pass variance for numerical robustness.
        inv_cnt = 1.0 / float(B * d_out)
        mean_r = batch_tile(batch_fold(
            jnp.sum(y, axis=-1, keepdims=True))) * inv_cnt
        yc = y - mean_r
        var_r = batch_tile(batch_fold(
            jnp.sum(yc * yc, axis=-1, keepdims=True))) * inv_cnt
        y = yc * jax.lax.rsqrt(var_r + BN_EPS) * g_ref[...] + be_ref[...]
        if relu:
            y = jnp.maximum(y, 0.0)
        return y

    h = gcn_layer(xf, w0_ref, b0_ref, g0_ref, be0_ref, True)
    h = gcn_layer(h, w1_ref, b1_ref, g1_ref, be1_ref, True)
    h = gcn_layer(h, w2_ref, b2_ref, g2_ref, be2_ref, False)

    # GatedSkipConnection: the two gate linears are fused into one MXU
    # contraction over the concatenated [in_x | h] features (K = 2*Dout).
    if project_residual:                  # in_dim != out_dim
        in_x = mxu(xf, wsc_ref[...])      # (B*N, Dout), f32
    else:
        in_x = xf
    gate_in = jnp.concatenate(
        [in_x.astype(matmul_dtype), h.astype(matmul_dtype)], axis=-1)
    z = jax.nn.sigmoid(
        jnp.dot(gate_in, wg_ref[...].astype(matmul_dtype),
                preferred_element_type=jnp.float32) + bg_ref[...])
    out = jnp.maximum(z * h + (1.0 - z) * in_x, 0.0)

    # Lane-pad the stored output to the full 128-lane buffer width so the
    # writeback is unmasked full-vreg stores; the wrapper strips the padding.
    d_out = out.shape[-1]
    lanes = out_ref.shape[-1]
    if lanes > d_out:
        out = jnp.concatenate(
            [out, jnp.zeros((BN, lanes - d_out), jnp.float32)], axis=-1)
    out_ref[...] = out
    # TODO(synk): a fully lane-dense (B, N*Dout) output needs an in-kernel
    # sublane->lane repack (reshape relayout); lane padding is used instead.


def _flops_estimate(B, N, params, project):
    BN = B * N
    in_dim = params['w0'].shape[0]
    out_dim = params['w2'].shape[1]
    flops = 0
    for i in range(3):
        d_in, d_out = params[f'w{i}'].shape
        flops += 2 * BN * d_in * d_out            # projection
        flops += 2 * BN * BN * min(d_in, d_out)   # block-diag aggregation
        flops += 14 * BN * d_out                  # bias fold + 2-pass BN + relu
    if project:
        flops += 2 * BN * in_dim * out_dim        # skip projection
    flops += 2 * BN * (2 * out_dim) * out_dim     # fused gate matmul
    flops += 8 * BN * out_dim                     # gate blend + relu
    transcendentals = BN * out_dim + 3 * BN       # sigmoid exp + BN rsqrt
    return int(flops), int(transcendentals)


def gcn_block_forward(x, adj, params, matmul_dtype=jnp.bfloat16):
    """Returns (out, adj), mirroring GCNBlock.forward (training-mode BN)."""
    B, N, Din = x.shape
    Dout = params['w2'].shape[1]
    project = params['w0'].shape[0] != Dout       # in_dim != out_dim
    BN_rows = B * N
    out_lanes = ((Dout + 127) // 128) * 128

    # Wrapper-side (XLA) prep: flatten x, block-diagonalize adj (binary 0/1 is
    # exact in bf16), precompute f32 row degrees, fuse gate weights, and tile
    # per-atom BN affine params to per-row vectors.
    xf = x.reshape(BN_rows, Din)
    adj_bd = (adj[:, :, None, :] *
              jnp.eye(B, dtype=adj.dtype)[:, None, :, None]
              ).reshape(BN_rows, BN_rows).astype(matmul_dtype)
    deg = jnp.sum(adj, axis=-1).reshape(BN_rows, 1)
    wg = jnp.concatenate([params['wci'], params['wco']], axis=0)   # (2*Dout, Dout)
    bg = params['bci'] + params['bco']                             # (1, Dout)

    inputs = [xf, adj_bd, deg]
    for i in range(3):
        inputs += [params[f'w{i}'], params[f'b{i}'],
                   jnp.tile(params[f'g{i}'], (B, 1)),
                   jnp.tile(params[f'be{i}'], (B, 1))]
    inputs += [params['wsc'], wg, bg]

    in_bytes = sum(int(np.prod(a.shape)) * a.dtype.itemsize for a in inputs)
    out_bytes = BN_rows * out_lanes * 4
    # Right-sized VMEM limit: derived from actual buffers, capped at 32 MiB so
    # the same plan leaves headroom on v7x's 64 MiB physical VMEM.
    vmem_limit = int(min(32 * 1024 * 1024,
                         max(8 * 1024 * 1024, 8 * (in_bytes + out_bytes))))
    flops, transc = _flops_estimate(B, N, params, project)

    out_flat = pl.pallas_call(
        functools.partial(gcn_block_kernel, batch=B, n_atom=N,
                          project_residual=project, matmul_dtype=matmul_dtype),
        out_shape=jax.ShapeDtypeStruct((BN_rows, out_lanes), jnp.float32),
        in_specs=[pl.BlockSpec(memory_space=pltpu.MemorySpace.VMEM)] * len(inputs),
        out_specs=pl.BlockSpec(memory_space=pltpu.MemorySpace.VMEM),
        compiler_params=pltpu.CompilerParams(vmem_limit_bytes=vmem_limit),
        cost_estimate=pl.CostEstimate(flops=flops, transcendentals=transc,
                                      bytes_accessed=int(in_bytes + out_bytes)),
    )(*inputs)
    return out_flat[:, :Dout].reshape(B, N, Dout), adj


def reference_forward(x, adj, p, project):
    """Pure-JAX f32 reference mirroring the PyTorch math (for validation)."""
    h = x
    for i in range(3):
        w, b, g, be = p[f'w{i}'], p[f'b{i}'], p[f'g{i}'], p[f'be{i}']
        y = jnp.einsum('bnd,df->bnf', h, w) + b[None, :, :]
        y = jnp.einsum('bnm,bmf->bnf', adj, y)
        mean = y.mean(axis=(0, 2), keepdims=True)
        var = ((y - mean) ** 2).mean(axis=(0, 2), keepdims=True)
        y = (y - mean) / jnp.sqrt(var + BN_EPS) * g[None, :, :] + be[None, :, :]
        if i != 2:
            y = jnp.maximum(y, 0.0)
        h = y
    in_x = jnp.einsum('bnd,df->bnf', x, p['wsc']) if project else x
    z = jax.nn.sigmoid(jnp.einsum('bnf,fg->bng', in_x, p['wci']) + p['bci'][None]
                       + jnp.einsum('bnf,fg->bng', h, p['wco']) + p['bco'][None])
    return jnp.maximum(z * h + (1.0 - z) * in_x, 0.0)


def init_params(key, in_dim, hidden_dim, out_dim, n_atom, n_layer=3):
    """Parameter init mirroring the PyTorch module shapes.
    Weights stored [in, out] (transpose of torch Linear.weight)."""
    dims = []
    for i in range(n_layer):
        d_in = in_dim if i == 0 else hidden_dim
        d_out = out_dim if i == n_layer - 1 else hidden_dim
        dims.append((d_in, d_out))

    keys = jax.random.split(key, 4 * n_layer + 5)
    p = {}
    ki = 0
    for i, (d_in, d_out) in enumerate(dims):
        bound_w = np.sqrt(6.0 / (d_in + d_out))          # xavier_uniform_
        p[f'w{i}'] = jax.random.uniform(keys[ki], (d_in, d_out), jnp.float32,
                                        -bound_w, bound_w); ki += 1
        bound_b = 1.0 / np.sqrt(d_in)
        p[f'b{i}'] = jax.random.uniform(keys[ki], (1, d_out), jnp.float32,
                                        -bound_b, bound_b); ki += 1
        p[f'g{i}'] = jnp.ones((n_atom, 1), jnp.float32)    # BN weight
        p[f'be{i}'] = jnp.zeros((n_atom, 1), jnp.float32)  # BN bias

    bsc = 1.0 / np.sqrt(in_dim)
    p['wsc'] = jax.random.uniform(keys[ki], (in_dim, out_dim), jnp.float32,
                                  -bsc, bsc); ki += 1
    bci = 1.0 / np.sqrt(out_dim)
    p['wci'] = jax.random.uniform(keys[ki], (out_dim, out_dim), jnp.float32,
                                  -bci, bci); ki += 1
    p['bci'] = jax.random.uniform(keys[ki], (1, out_dim), jnp.float32,
                                  -bci, bci); ki += 1
    p['wco'] = jax.random.uniform(keys[ki], (out_dim, out_dim), jnp.float32,
                                  -bci, bci); ki += 1
    p['bco'] = jax.random.uniform(keys[ki], (1, out_dim), jnp.float32,
                                  -bci, bci); ki += 1
    return p


if __name__ == "__main__":
    # GCNBlock(n_layer=3, in_dim=16, hidden_dim=32, out_dim=32, n_atom=8,
    #          bn=True, sc='gsc')
    B, n_atom = 2, 8
    in_dim, hidden_dim, out_dim = 16, 32, 32

    key = jax.random.PRNGKey(0)
    k_param, k_x, k_adj = jax.random.split(key, 3)

    params = init_params(k_param, in_dim, hidden_dim, out_dim, n_atom)

    x = jax.random.normal(k_x, (B, n_atom, in_dim), jnp.float32)
    # random symmetric binary adjacency with self loops
    a = (jax.random.uniform(k_adj, (B, n_atom, n_atom)) < 0.4).astype(jnp.float32)
    adj = jnp.clip(a + jnp.transpose(a, (0, 2, 1))
                   + jnp.eye(n_atom, dtype=jnp.float32)[None], 0.0, 1.0)

    ref = reference_forward(x, adj, params, project=(in_dim != out_dim))

    # Strict check: f32 matmul path vs. f32 reference (validation only).
    out_f32, adj_out = gcn_block_forward(x, adj, params,
                                         matmul_dtype=jnp.float32)
    out_f32 = jax.block_until_ready(out_f32)
    np.testing.assert_allclose(np.asarray(out_f32), np.asarray(ref),
                               rtol=1e-3, atol=1e-3)

    # Production path: bf16 MXU operands / f32 accumulation (looser tolerance).
    out_bf16, _ = gcn_block_forward(x, adj, params,
                                    matmul_dtype=jnp.bfloat16)
    out_bf16 = jax.block_until_ready(out_bf16)
    np.testing.assert_allclose(np.asarray(out_bf16), np.asarray(ref),
                               rtol=0.15, atol=0.15)

    assert out_f32.shape == (B, n_atom, out_dim)
    assert adj_out.shape == (B, n_atom, n_atom)

    print("KERNEL_OK")
</pallas_src>

<mosaic_0001>
module attributes {stable_mosaic.version = 11 : i64} {
  func.func @gcn_block_kernel(%arg0: memref<16x16xf32, #tpu.memory_space<vmem>>, %arg1: memref<16x16xf32, #tpu.memory_space<vmem>>, %arg2: memref<16x1xf32, #tpu.memory_space<vmem>>, %arg3: memref<16x32xf32, #tpu.memory_space<vmem>>, %arg4: memref<1x32xf32, #tpu.memory_space<vmem>>, %arg5: memref<16x1xf32, #tpu.memory_space<vmem>>, %arg6: memref<16x1xf32, #tpu.memory_space<vmem>>, %arg7: memref<32x32xf32, #tpu.memory_space<vmem>>, %arg8: memref<1x32xf32, #tpu.memory_space<vmem>>, %arg9: memref<16x1xf32, #tpu.memory_space<vmem>>, %arg10: memref<16x1xf32, #tpu.memory_space<vmem>>, %arg11: memref<32x32xf32, #tpu.memory_space<vmem>>, %arg12: memref<1x32xf32, #tpu.memory_space<vmem>>, %arg13: memref<16x1xf32, #tpu.memory_space<vmem>>, %arg14: memref<16x1xf32, #tpu.memory_space<vmem>>, %arg15: memref<16x32xf32, #tpu.memory_space<vmem>>, %arg16: memref<64x32xf32, #tpu.memory_space<vmem>>, %arg17: memref<1x32xf32, #tpu.memory_space<vmem>>, %arg18: memref<16x128xf32, #tpu.memory_space<vmem>>) attributes {dimension_semantics = [], scalar_prefetch = 0 : i64, scratch_operands = 0 : i64, tpu.core_type = #tpu.core_type<tc>} {
    %c0 = arith.constant 0 : index
    %c0_0 = arith.constant 0 : index
    %0 = vector.load %arg0[%c0, %c0_0] : memref<16x16xf32, #tpu.memory_space<vmem>>, vector<16x16xf32>
    %c0_1 = arith.constant 0 : index
    %c0_2 = arith.constant 0 : index
    %1 = vector.load %arg1[%c0_1, %c0_2] : memref<16x16xf32, #tpu.memory_space<vmem>>, vector<16x16xf32>
    %c0_3 = arith.constant 0 : index
    %c0_4 = arith.constant 0 : index
    %2 = vector.load %arg2[%c0_3, %c0_4] : memref<16x1xf32, #tpu.memory_space<vmem>>, vector<16x1xf32>
    %c0_5 = arith.constant 0 : index
    %c0_6 = arith.constant 0 : index
    %3 = vector.load %arg3[%c0_5, %c0_6] : memref<16x32xf32, #tpu.memory_space<vmem>>, vector<16x32xf32>
    %cst = arith.constant dense<0.000000e+00> : vector<16x16xf32>
    %4 = tpu.matmul %1, %0, %cst {dimension_numbers = #tpu.dot_dimension_numbers<[1], [0], [0], [1], [0, 0, 1, 1], [], []>} : vector<16x16xf32>, vector<16x16xf32>, vector<16x16xf32> -> vector<16x16xf32>
    %cst_7 = arith.constant dense<0.000000e+00> : vector<16x32xf32>
    %5 = tpu.matmul %4, %3, %cst_7 {dimension_numbers = #tpu.dot_dimension_numbers<[1], [0], [0], [1], [0, 0, 1, 1], [], []>} : vector<16x16xf32>, vector<16x32xf32>, vector<16x32xf32> -> vector<16x32xf32>
    %c0_8 = arith.constant 0 : index
    %c0_9 = arith.constant 0 : index
    %6 = vector.load %arg4[%c0_8, %c0_9] : memref<1x32xf32, #tpu.memory_space<vmem>>, vector<1x32xf32>
    %7 = vector.broadcast %2 : vector<16x1xf32> to vector<16x32xf32>
    %8 = vector.broadcast %6 : vector<1x32xf32> to vector<16x32xf32>
    %9 = arith.mulf %7, %8 : vector<16x32xf32>
    %10 = arith.addf %5, %9 : vector<16x32xf32>
    %cst_10 = arith.constant dense<0.000000e+00> : vector<16xf32>
    %11 = vector.multi_reduction <add>, %10, %cst_10 [1] : vector<16x32xf32> to vector<16xf32>
    %12 = vector.shape_cast %11 : vector<16xf32> to vector<16x1xf32>
    %13 = vector.extract_strided_slice %12 {offsets = [0, 0], sizes = [8, 1], strides = [1, 1]} : vector<16x1xf32> to vector<8x1xf32>
    %14 = vector.extract_strided_slice %12 {offsets = [8, 0], sizes = [8, 1], strides = [1, 1]} : vector<16x1xf32> to vector<8x1xf32>
    %15 = arith.addf %13, %14 : vector<8x1xf32>
    %16 = tpu.concatenate %15, %15 in 0 : vector<8x1xf32>, vector<8x1xf32> -> vector<16x1xf32>
    %cst_11 = arith.constant 1.562500e-02 : f32
    %17 = vector.broadcast %cst_11 : f32 to vector<16x1xf32>
    %18 = arith.mulf %16, %17 : vector<16x1xf32>
    %19 = vector.broadcast %18 : vector<16x1xf32> to vector<16x32xf32>
    %20 = arith.subf %10, %19 : vector<16x32xf32>
    %21 = arith.mulf %20, %20 : vector<16x32xf32>
    %cst_12 = arith.constant dense<0.000000e+00> : vector<16xf32>
    %22 = vector.multi_reduction <add>, %21, %cst_12 [1] : vector<16x32xf32> to vector<16xf32>
    %23 = vector.shape_cast %22 : vector<16xf32> to vector<16x1xf32>
    %24 = vector.extract_strided_slice %23 {offsets = [0, 0], sizes = [8, 1], strides = [1, 1]} : vector<16x1xf32> to vector<8x1xf32>
    %25 = vector.extract_strided_slice %23 {offsets = [8, 0], sizes = [8, 1], strides = [1, 1]} : vector<16x1xf32> to vector<8x1xf32>
    %26 = arith.addf %24, %25 : vector<8x1xf32>
    %27 = tpu.concatenate %26, %26 in 0 : vector<8x1xf32>, vector<8x1xf32> -> vector<16x1xf32>
    %cst_13 = arith.constant 1.562500e-02 : f32
    %28 = vector.broadcast %cst_13 : f32 to vector<16x1xf32>
    %29 = arith.mulf %27, %28 : vector<16x1xf32>
    %cst_14 = arith.constant 9.99999974E-6 : f32
    %30 = vector.broadcast %cst_14 : f32 to vector<16x1xf32>
    %31 = arith.addf %29, %30 : vector<16x1xf32>
    %32 = math.rsqrt %31 : vector<16x1xf32>
    %33 = vector.broadcast %32 : vector<16x1xf32> to vector<16x32xf32>
    %34 = arith.mulf %20, %33 : vector<16x32xf32>
    %c0_15 = arith.constant 0 : index
    %c0_16 = arith.constant 0 : index
    %35 = vector.load %arg5[%c0_15, %c0_16] : memref<16x1xf32, #tpu.memory_space<vmem>>, vector<16x1xf32>
    %36 = vector.broadcast %35 : vector<16x1xf32> to vector<16x32xf32>
    %37 = arith.mulf %34, %36 : vector<16x32xf32>
    %c0_17 = arith.constant 0 : index
    %c0_18 = arith.constant 0 : index
    %38 = vector.load %arg6[%c0_17, %c0_18] : memref<16x1xf32, #tpu.memory_space<vmem>>, vector<16x1xf32>
    %39 = vector.broadcast %38 : vector<16x1xf32> to vector<16x32xf32>
    %40 = arith.addf %37, %39 : vector<16x32xf32>
    %cst_19 = arith.constant 0.000000e+00 : f32
    %41 = vector.broadcast %cst_19 : f32 to vector<16x32xf32>
    %42 = arith.maximumf %40, %41 : vector<16x32xf32>
    %c0_20 = arith.constant 0 : index
    %c0_21 = arith.constant 0 : index
    %43 = vector.load %arg7[%c0_20, %c0_21] : memref<32x32xf32, #tpu.memory_space<vmem>>, vector<32x32xf32>
    %cst_22 = arith.constant dense<0.000000e+00> : vector<16x32xf32>
    %44 = tpu.matmul %1, %42, %cst_22 {dimension_numbers = #tpu.dot_dimension_numbers<[1], [0], [0], [1], [0, 0, 1, 1], [], []>} : vector<16x16xf32>, vector<16x32xf32>, vector<16x32xf32> -> vector<16x32xf32>
    %cst_23 = arith.constant dense<0.000000e+00> : vector<16x32xf32>
    %45 = tpu.matmul %44, %43, %cst_23 {dimension_numbers = #tpu.dot_dimension_numbers<[1], [0], [0], [1], [0, 0, 1, 1], [], []>} : vector<16x32xf32>, vector<32x32xf32>, vector<16x32xf32> -> vector<16x32xf32>
    %c0_24 = arith.constant 0 : index
    %c0_25 = arith.constant 0 : index
    %46 = vector.load %arg8[%c0_24, %c0_25] : memref<1x32xf32, #tpu.memory_space<vmem>>, vector<1x32xf32>
    %47 = vector.broadcast %2 : vector<16x1xf32> to vector<16x32xf32>
    %48 = vector.broadcast %46 : vector<1x32xf32> to vector<16x32xf32>
    %49 = arith.mulf %47, %48 : vector<16x32xf32>
    %50 = arith.addf %45, %49 : vector<16x32xf32>
    %cst_26 = arith.constant dense<0.000000e+00> : vector<16xf32>
    %51 = vector.multi_reduction <add>, %50, %cst_26 [1] : vector<16x32xf32> to vector<16xf32>
    %52 = vector.shape_cast %51 : vector<16xf32> to vector<16x1xf32>
    %53 = vector.extract_strided_slice %52 {offsets = [0, 0], sizes = [8, 1], strides = [1, 1]} : vector<16x1xf32> to vector<8x1xf32>
    %54 = vector.extract_strided_slice %52 {offsets = [8, 0], sizes = [8, 1], strides = [1, 1]} : vector<16x1xf32> to vector<8x1xf32>
    %55 = arith.addf %53, %54 : vector<8x1xf32>
    %56 = tpu.concatenate %55, %55 in 0 : vector<8x1xf32>, vector<8x1xf32> -> vector<16x1xf32>
    %cst_27 = arith.constant 1.562500e-02 : f32
    %57 = vector.broadcast %cst_27 : f32 to vector<16x1xf32>
    %58 = arith.mulf %56, %57 : vector<16x1xf32>
    %59 = vector.broadcast %58 : vector<16x1xf32> to vector<16x32xf32>
    %60 = arith.subf %50, %59 : vector<16x32xf32>
    %61 = arith.mulf %60, %60 : vector<16x32xf32>
    %cst_28 = arith.constant dense<0.000000e+00> : vector<16xf32>
    %62 = vector.multi_reduction <add>, %61, %cst_28 [1] : vector<16x32xf32> to vector<16xf32>
    %63 = vector.shape_cast %62 : vector<16xf32> to vector<16x1xf32>
    %64 = vector.extract_strided_slice %63 {offsets = [0, 0], sizes = [8, 1], strides = [1, 1]} : vector<16x1xf32> to vector<8x1xf32>
    %65 = vector.extract_strided_slice %63 {offsets = [8, 0], sizes = [8, 1], strides = [1, 1]} : vector<16x1xf32> to vector<8x1xf32>
    %66 = arith.addf %64, %65 : vector<8x1xf32>
    %67 = tpu.concatenate %66, %66 in 0 : vector<8x1xf32>, vector<8x1xf32> -> vector<16x1xf32>
    %cst_29 = arith.constant 1.562500e-02 : f32
    %68 = vector.broadcast %cst_29 : f32 to vector<16x1xf32>
    %69 = arith.mulf %67, %68 : vector<16x1xf32>
    %cst_30 = arith.constant 9.99999974E-6 : f32
    %70 = vector.broadcast %cst_30 : f32 to vector<16x1xf32>
    %71 = arith.addf %69, %70 : vector<16x1xf32>
    %72 = math.rsqrt %71 : vector<16x1xf32>
    %73 = vector.broadcast %72 : vector<16x1xf32> to vector<16x32xf32>
    %74 = arith.mulf %60, %73 : vector<16x32xf32>
    %c0_31 = arith.constant 0 : index
    %c0_32 = arith.constant 0 : index
    %75 = vector.load %arg9[%c0_31, %c0_32] : memref<16x1xf32, #tpu.memory_space<vmem>>, vector<16x1xf32>
    %76 = vector.broadcast %75 : vector<16x1xf32> to vector<16x32xf32>
    %77 = arith.mulf %74, %76 : vector<16x32xf32>
    %c0_33 = arith.constant 0 : index
    %c0_34 = arith.constant 0 : index
    %78 = vector.load %arg10[%c0_33, %c0_34] : memref<16x1xf32, #tpu.memory_space<vmem>>, vector<16x1xf32>
    %79 = vector.broadcast %78 : vector<16x1xf32> to vector<16x32xf32>
    %80 = arith.addf %77, %79 : vector<16x32xf32>
    %cst_35 = arith.constant 0.000000e+00 : f32
    %81 = vector.broadcast %cst_35 : f32 to vector<16x32xf32>
    %82 = arith.maximumf %80, %81 : vector<16x32xf32>
    %c0_36 = arith.constant 0 : index
    %c0_37 = arith.constant 0 : index
    %83 = vector.load %arg11[%c0_36, %c0_37] : memref<32x32xf32, #tpu.memory_space<vmem>>, vector<32x32xf32>
    %cst_38 = arith.constant dense<0.000000e+00> : vector<16x32xf32>
    %84 = tpu.matmul %1, %82, %cst_38 {dimension_numbers = #tpu.dot_dimension_numbers<[1], [0], [0], [1], [0, 0, 1, 1], [], []>} : vector<16x16xf32>, vector<16x32xf32>, vector<16x32xf32> -> vector<16x32xf32>
    %cst_39 = arith.constant dense<0.000000e+00> : vector<16x32xf32>
    %85 = tpu.matmul %84, %83, %cst_39 {dimension_numbers = #tpu.dot_dimension_numbers<[1], [0], [0], [1], [0, 0, 1, 1], [], []>} : vector<16x32xf32>, vector<32x32xf32>, vector<16x32xf32> -> vector<16x32xf32>
    %c0_40 = arith.constant 0 : index
    %c0_41 = arith.constant 0 : index
    %86 = vector.load %arg12[%c0_40, %c0_41] : memref<1x32xf32, #tpu.memory_space<vmem>>, vector<1x32xf32>
    %87 = vector.broadcast %2 : vector<16x1xf32> to vector<16x32xf32>
    %88 = vector.broadcast %86 : vector<1x32xf32> to vector<16x32xf32>
    %89 = arith.mulf %87, %88 : vector<16x32xf32>
    %90 = arith.addf %85, %89 : vector<16x32xf32>
    %cst_42 = arith.constant dense<0.000000e+00> : vector<16xf32>
    %91 = vector.multi_reduction <add>, %90, %cst_42 [1] : vector<16x32xf32> to vector<16xf32>
    %92 = vector.shape_cast %91 : vector<16xf32> to vector<16x1xf32>
    %93 = vector.extract_strided_slice %92 {offsets = [0, 0], sizes = [8, 1], strides = [1, 1]} : vector<16x1xf32> to vector<8x1xf32>
    %94 = vector.extract_strided_slice %92 {offsets = [8, 0], sizes = [8, 1], strides = [1, 1]} : vector<16x1xf32> to vector<8x1xf32>
    %95 = arith.addf %93, %94 : vector<8x1xf32>
    %96 = tpu.concatenate %95, %95 in 0 : vector<8x1xf32>, vector<8x1xf32> -> vector<16x1xf32>
    %cst_43 = arith.constant 1.562500e-02 : f32
    %97 = vector.broadcast %cst_43 : f32 to vector<16x1xf32>
    %98 = arith.mulf %96, %97 : vector<16x1xf32>
    %99 = vector.broadcast %98 : vector<16x1xf32> to vector<16x32xf32>
    %100 = arith.subf %90, %99 : vector<16x32xf32>
    %101 = arith.mulf %100, %100 : vector<16x32xf32>
    %cst_44 = arith.constant dense<0.000000e+00> : vector<16xf32>
    %102 = vector.multi_reduction <add>, %101, %cst_44 [1] : vector<16x32xf32> to vector<16xf32>
    %103 = vector.shape_cast %102 : vector<16xf32> to vector<16x1xf32>
    %104 = vector.extract_strided_slice %103 {offsets = [0, 0], sizes = [8, 1], strides = [1, 1]} : vector<16x1xf32> to vector<8x1xf32>
    %105 = vector.extract_strided_slice %103 {offsets = [8, 0], sizes = [8, 1], strides = [1, 1]} : vector<16x1xf32> to vector<8x1xf32>
    %106 = arith.addf %104, %105 : vector<8x1xf32>
    %107 = tpu.concatenate %106, %106 in 0 : vector<8x1xf32>, vector<8x1xf32> -> vector<16x1xf32>
    %cst_45 = arith.constant 1.562500e-02 : f32
    %108 = vector.broadcast %cst_45 : f32 to vector<16x1xf32>
    %109 = arith.mulf %107, %108 : vector<16x1xf32>
    %cst_46 = arith.constant 9.99999974E-6 : f32
    %110 = vector.broadcast %cst_46 : f32 to vector<16x1xf32>
    %111 = arith.addf %109, %110 : vector<16x1xf32>
    %112 = math.rsqrt %111 : vector<16x1xf32>
    %113 = vector.broadcast %112 : vector<16x1xf32> to vector<16x32xf32>
    %114 = arith.mulf %100, %113 : vector<16x32xf32>
    %c0_47 = arith.constant 0 : index
    %c0_48 = arith.constant 0 : index
    %115 = vector.load %arg13[%c0_47, %c0_48] : memref<16x1xf32, #tpu.memory_space<vmem>>, vector<16x1xf32>
    %116 = vector.broadcast %115 : vector<16x1xf32> to vector<16x32xf32>
    %117 = arith.mulf %114, %116 : vector<16x32xf32>
    %c0_49 = arith.constant 0 : index
    %c0_50 = arith.constant 0 : index
    %118 = vector.load %arg14[%c0_49, %c0_50] : memref<16x1xf32, #tpu.memory_space<vmem>>, vector<16x1xf32>
    %119 = vector.broadcast %118 : vector<16x1xf32> to vector<16x32xf32>
    %120 = arith.addf %117, %119 : vector<16x32xf32>
    %c0_51 = arith.constant 0 : index
    %c0_52 = arith.constant 0 : index
    %121 = vector.load %arg15[%c0_51, %c0_52] : memref<16x32xf32, #tpu.memory_space<vmem>>, vector<16x32xf32>
    %cst_53 = arith.constant dense<0.000000e+00> : vector<16x32xf32>
    %122 = tpu.matmul %0, %121, %cst_53 {dimension_numbers = #tpu.dot_dimension_numbers<[1], [0], [0], [1], [0, 0, 1, 1], [], []>} : vector<16x16xf32>, vector<16x32xf32>, vector<16x32xf32> -> vector<16x32xf32>
    %123 = tpu.concatenate %122, %120 in 1 : vector<16x32xf32>, vector<16x32xf32> -> vector<16x64xf32>
    %c0_54 = arith.constant 0 : index
    %c0_55 = arith.constant 0 : index
    %124 = vector.load %arg16[%c0_54, %c0_55] : memref<64x32xf32, #tpu.memory_space<vmem>>, vector<64x32xf32>
    %cst_56 = arith.constant dense<0.000000e+00> : vector<16x32xf32>
    %125 = tpu.matmul %123, %124, %cst_56 {dimension_numbers = #tpu.dot_dimension_numbers<[1], [0], [0], [1], [0, 0, 1, 1], [], []>} : vector<16x64xf32>, vector<64x32xf32>, vector<16x32xf32> -> vector<16x32xf32>
    %c0_57 = arith.constant 0 : index
    %c0_58 = arith.constant 0 : index
    %126 = vector.load %arg17[%c0_57, %c0_58] : memref<1x32xf32, #tpu.memory_space<vmem>>, vector<1x32xf32>
    %127 = vector.broadcast %126 : vector<1x32xf32> to vector<16x32xf32>
    %128 = arith.addf %125, %127 : vector<16x32xf32>
    %129 = arith.negf %128 : vector<16x32xf32>
    %130 = math.exp %129 : vector<16x32xf32>
    %cst_59 = arith.constant 1.000000e+00 : f32
    %131 = vector.broadcast %cst_59 : f32 to vector<16x32xf32>
    %132 = arith.addf %131, %130 : vector<16x32xf32>
    %133 = arith.divf %131, %132 : vector<16x32xf32>
    %134 = arith.mulf %133, %120 : vector<16x32xf32>
    %cst_60 = arith.constant 1.000000e+00 : f32
    %135 = vector.broadcast %cst_60 : f32 to vector<16x32xf32>
    %136 = arith.subf %135, %133 : vector<16x32xf32>
    %137 = arith.mulf %136, %122 : vector<16x32xf32>
    %138 = arith.addf %134, %137 : vector<16x32xf32>
    %cst_61 = arith.constant 0.000000e+00 : f32
    %139 = vector.broadcast %cst_61 : f32 to vector<16x32xf32>
    %140 = arith.maximumf %138, %139 : vector<16x32xf32>
    %cst_62 = arith.constant 0.000000e+00 : f32
    %141 = vector.broadcast %cst_62 : f32 to vector<16x96xf32>
    %142 = tpu.concatenate %140, %141 in 1 : vector<16x32xf32>, vector<16x96xf32> -> vector<16x128xf32>
    %c0_63 = arith.constant 0 : index
    %c0_64 = arith.constant 0 : index
    %143 = vector.load %arg18[%c0_63, %c0_64] : memref<16x128xf32, #tpu.memory_space<vmem>>, vector<16x128xf32>
    tpu.vector_store %arg18[%c0_63, %c0_64], %142 {strides = array<i32>} : memref<16x128xf32, #tpu.memory_space<vmem>>, vector<16x128xf32>,
    return
  }
}

</mosaic_0001>

<llo_original>
// kernel: tpu_custom_call.1
$region0: #{tpu_custom_call.1}
  #allocation0 [shape = 'u32[]', space=smem, size = 0x4, offset = 0x4, fixed_abs, tag = 'smem constant byte address 0x4 - core index']
  #allocation1 [shape = 'u32[72,128]{1,0:T(1,128)}', space=vmem, size = 0x9000, scoped, tag = 'internal scratch']
  %s0 = inlined_call_operand.vmem [shape: f32[16,16], index: 0, kind: input, shape index: {}]
  %s1 = inlined_call_operand.vmem [shape: f32[16,16], index: 1, kind: input, shape index: {}]
  %s2 = inlined_call_operand.vmem [shape: f32[16,1], index: 2, kind: input, shape index: {}]
  %s3 = inlined_call_operand.vmem [shape: f32[16,32], index: 3, kind: input, shape index: {}]
  %s4 = inlined_call_operand.vmem [shape: f32[1,32], index: 4, kind: input, shape index: {}]
  %s5 = inlined_call_operand.vmem [shape: f32[16,1], index: 5, kind: input, shape index: {}]
  %s6 = inlined_call_operand.vmem [shape: f32[16,1], index: 6, kind: input, shape index: {}]
  %s7 = inlined_call_operand.vmem [shape: f32[32,32], index: 7, kind: input, shape index: {}]
  %s8 = inlined_call_operand.vmem [shape: f32[1,32], index: 8, kind: input, shape index: {}]
  %s9 = inlined_call_operand.vmem [shape: f32[16,1], index: 9, kind: input, shape index: {}]
  %s10 = inlined_call_operand.vmem [shape: f32[16,1], index: 10, kind: input, shape index: {}]
  %s11 = inlined_call_operand.vmem [shape: f32[32,32], index: 11, kind: input, shape index: {}]
  %s12 = inlined_call_operand.vmem [shape: f32[1,32], index: 12, kind: input, shape index: {}]
  %s13 = inlined_call_operand.vmem [shape: f32[16,1], index: 13, kind: input, shape index: {}]
  %s14 = inlined_call_operand.vmem [shape: f32[16,1], index: 14, kind: input, shape index: {}]
  %s15 = inlined_call_operand.vmem [shape: f32[16,32], index: 15, kind: input, shape index: {}]
  %s16 = inlined_call_operand.vmem [shape: f32[64,32], index: 16, kind: input, shape index: {}]
  %s17 = inlined_call_operand.vmem [shape: f32[1,32], index: 17, kind: input, shape index: {}]
  %s18 = inlined_call_operand.hbm [shape: f32[16,128], index: 18, kind: output, shape index: {}]
  %s19 = sld [smem:[#allocation0]]
  $region82: #{tpu_custom_call.1} parent=0
    _
  %s21 = ssub.s32 1, %s19
  %s22 = scalar_select 0, %s21, %s19
  $region1: #{tpu_custom_call.1} parent=0
    #allocation2 [shape = 'u8[8192]{0}', space=vmem, size = 0x2000, scoped, tag = 'output window, operand 0, single buffered']
    #allocation3 [shape = 's32[1]{0}', space=sflag, size = 0x4, scoped, tag = 'scoped memory for tpu_custom_call.1']
    %23 = vsyncpa [#allocation3], 0
    // Predicated region
    $region2: #{tpu_custom_call.1} parent=1 // pred_check
      _
    $region3: #{tpu_custom_call.1} parent=1 // pred_check_branch
      %25 = sbr.rel (0) target = $region5
    $region4: #{tpu_custom_call.1} parent=1 // pred_region
      _
    $region5: #{tpu_custom_call.1} parent=1 // pred_fallthru
      _
    // Predicated region
    $region6: #{tpu_custom_call.1} parent=1 // pred_check
      _
    $region7: #{tpu_custom_call.1} parent=1 // pred_check_branch
      %27 = sbr.rel (0) target = $region9
    $region8: #{tpu_custom_call.1} parent=1 // pred_region
      _
    $region9: #{tpu_custom_call.1} parent=1 // pred_fallthru
      _
    // Predicated region
    $region10: #{tpu_custom_call.1} parent=1 // pred_check
      _
    $region11: #{tpu_custom_call.1} parent=1 // pred_check_branch
      %29 = sbr.rel (0) target = $region13
    $region12: #{tpu_custom_call.1} parent=1 // pred_region
      _
    $region13: #{tpu_custom_call.1} parent=1 // pred_fallthru
      _
    // Predicated region
    $region14: #{tpu_custom_call.1} parent=1 // pred_check
      _
    $region15: #{tpu_custom_call.1} parent=1 // pred_check_branch
      %31 = sbr.rel (0) target = $region17
    $region16: #{tpu_custom_call.1} parent=1 // pred_region
      _
    $region17: #{tpu_custom_call.1} parent=1 // pred_fallthru
      _
    // Predicated region
    $region18: #{tpu_custom_call.1} parent=1 // pred_check
      _
    $region19: #{tpu_custom_call.1} parent=1 // pred_check_branch
      %33 = sbr.rel (0) target = $region21
    $region20: #{tpu_custom_call.1} parent=1 // pred_region
      _
    $region21: #{tpu_custom_call.1} parent=1 // pred_fallthru
      _
    // Predicated region
    $region22: #{tpu_custom_call.1} parent=1 // pred_check
      _
    $region23: #{tpu_custom_call.1} parent=1 // pred_check_branch
      %35 = sbr.rel (0) target = $region25
    $region24: #{tpu_custom_call.1} parent=1 // pred_region
      _
    $region25: #{tpu_custom_call.1} parent=1 // pred_fallthru
      _
    // Predicated region
    $region26: #{tpu_custom_call.1} parent=1 // pred_check
      _
    $region27: #{tpu_custom_call.1} parent=1 // pred_check_branch
      %37 = sbr.rel (0) target = $region29
    $region28: #{tpu_custom_call.1} parent=1 // pred_region
      _
    $region29: #{tpu_custom_call.1} parent=1 // pred_fallthru
      _
    // Predicated region
    $region30: #{tpu_custom_call.1} parent=1 // pred_check
      _
    $region31: #{tpu_custom_call.1} parent=1 // pred_check_branch
      %39 = sbr.rel (0) target = $region33
    $region32: #{tpu_custom_call.1} parent=1 // pred_region
      _
    $region33: #{tpu_custom_call.1} parent=1 // pred_fallthru
      _
    // Predicated region
    $region34: #{tpu_custom_call.1} parent=1 // pred_check
      _
    $region35: #{tpu_custom_call.1} parent=1 // pred_check_branch
      %41 = sbr.rel (0) target = $region37
    $region36: #{tpu_custom_call.1} parent=1 // pred_region
      _
    $region37: #{tpu_custom_call.1} parent=1 // pred_fallthru
      _
    // Predicated region
    $region38: #{tpu_custom_call.1} parent=1 // pred_check
      _
    $region39: #{tpu_custom_call.1} parent=1 // pred_check_branch
      %43 = sbr.rel (0) target = $region41
    $region40: #{tpu_custom_call.1} parent=1 // pred_region
      _
    $region41: #{tpu_custom_call.1} parent=1 // pred_fallthru
      _
    // Predicated region
    $region42: #{tpu_custom_call.1} parent=1 // pred_check
      _
    $region43: #{tpu_custom_call.1} parent=1 // pred_check_branch
      %45 = sbr.rel (0) target = $region45
    $region44: #{tpu_custom_call.1} parent=1 // pred_region
      _
    $region45: #{tpu_custom_call.1} parent=1 // pred_fallthru
      _
    // Predicated region
    $region46: #{tpu_custom_call.1} parent=1 // pred_check
      _
    $region47: #{tpu_custom_call.1} parent=1 // pred_check_branch
      %47 = sbr.rel (0) target = $region49
    $region48: #{tpu_custom_call.1} parent=1 // pred_region
      _
    $region49: #{tpu_custom_call.1} parent=1 // pred_fallthru
      _
    // Predicated region
    $region50: #{tpu_custom_call.1} parent=1 // pred_check
      _
    $region51: #{tpu_custom_call.1} parent=1 // pred_check_branch
      %49 = sbr.rel (0) target = $region53
    $region52: #{tpu_custom_call.1} parent=1 // pred_region
      _
    $region53: #{tpu_custom_call.1} parent=1 // pred_fallthru
      _
    // Predicated region
    $region54: #{tpu_custom_call.1} parent=1 // pred_check
      _
    $region55: #{tpu_custom_call.1} parent=1 // pred_check_branch
      %51 = sbr.rel (0) target = $region57
    $region56: #{tpu_custom_call.1} parent=1 // pred_region
      _
    $region57: #{tpu_custom_call.1} parent=1 // pred_fallthru
      _
    // Predicated region
    $region58: #{tpu_custom_call.1} parent=1 // pred_check
      _
    $region59: #{tpu_custom_call.1} parent=1 // pred_check_branch
      %53 = sbr.rel (0) target = $region61
    $region60: #{tpu_custom_call.1} parent=1 // pred_region
      _
    $region61: #{tpu_custom_call.1} parent=1 // pred_fallthru
      _
    // Predicated region
    $region62: #{tpu_custom_call.1} parent=1 // pred_check
      _
    $region63: #{tpu_custom_call.1} parent=1 // pred_check_branch
      %55 = sbr.rel (0) target = $region65
    $region64: #{tpu_custom_call.1} parent=1 // pred_region
      _
    $region65: #{tpu_custom_call.1} parent=1 // pred_fallthru
      _
    // Predicated region
    $region66: #{tpu_custom_call.1} parent=1 // pred_check
      _
    $region67: #{tpu_custom_call.1} parent=1 // pred_check_branch
      %57 = sbr.rel (0) target = $region69
    $region68: #{tpu_custom_call.1} parent=1 // pred_region
      _
    $region69: #{tpu_custom_call.1} parent=1 // pred_fallthru
      _
    // Predicated region
    $region70: #{tpu_custom_call.1} parent=1 // pred_check
      _
    $region71: #{tpu_custom_call.1} parent=1 // pred_check_branch
      %59 = sbr.rel (0) target = $region73
    $region72: #{tpu_custom_call.1} parent=1 // pred_region
      _
    $region73: #{tpu_custom_call.1} parent=1 // pred_fallthru
      _
    %v60 = vld [vmem:[%s0] sm:$0xff]
    %v61 = vld [vmem:[%s0 + $0x8] sm:$0xff]
    %v62 = vld [vmem:[%s1] sm:$0xff]
    %v63 = vld [vmem:[%s1 + $0x8] sm:$0xff]
    %v64 = vld [vmem:[%s2] sm:$0xff]
    %v65 = vld [vmem:[%s2 + $0x8] sm:$0xff]
    %v66 = vld [vmem:[%s3] sm:$0xff]
    %v67 = vld [vmem:[%s3 + $0x8] sm:$0xff]
    %vm68 = vcmask 130048
    %v70 = vsel %vm68, %v62, 0
    %v73 = vsel %vm68, %v63, 0
    %75 = vmatpush.msra.mxu0 0.0
    %76 = vmatpush.msra.mxu0 0.0
    %77 = vmatpush.msra.mxu0 0.0
    %78 = vmatpush.msra.mxu0 0.0
    %79 = vmatpush.msra.mxu0 0.0
    %80 = vmatpush.msra.mxu0 0.0
    %81 = vmatpush.msra.mxu0 0.0
    %82 = vmatpush.msra.mxu0 0.0
    %83 = vmatpush.msra.mxu0 0.0
    %84 = vmatpush.msra.mxu0 0.0
    %85 = vmatpush.msra.mxu0 0.0
    %86 = vmatpush.msra.mxu0 0.0
    %87 = vmatpush.msra.mxu0 0.0
    %88 = vmatpush.msra.mxu0 0.0
    %89 = vmatpush.msra.mxu0 %v61
    %90 = vmatpush.msra.mxu0 %v60
    %91 = vmatmul.f32.gmra.mxu0 %v70
    %v92 = vpop.f32.mrf.mxu0
    %v93 = vadd.f32 0.0, %v92
    %94 = vmatmul.f32.gmra.mxu0 %v73
    %v95 = vpop.f32.mrf.mxu0
    %v96 = vadd.f32 0.0, %v95
    %97 = vdwg.mxu0
    %v98 = vld [vmem:[%s4] sm:$0x1]
    %100 = vset.pattern.permute.xlu0 0
    %101 = vperm.xlu0 %100, %v64
    %v102 = vpop.permute.xlu0 %101
    %105 = vset.pattern.permute.xlu0 0
    %106 = vperm.xlu0 %105, %v65
    %v107 = vpop.permute.xlu0 %106
    %v110 = vperm.slane %v98, 0
    %v112 = vmul.f32 %v102, %v110
    %v113 = vmul.f32 %v107, %v110
    %v115 = vsel %vm68, %v93, 0
    %v118 = vsel %vm68, %v96, 0
    %120 = vmatpush.msra.mxu0 0.0
    %121 = vmatpush.msra.mxu0 0.0
    %122 = vmatpush.msra.mxu0 0.0
    %123 = vmatpush.msra.mxu0 0.0
    %124 = vmatpush.msra.mxu0 0.0
    %125 = vmatpush.msra.mxu0 0.0
    %126 = vmatpush.msra.mxu0 0.0
    %127 = vmatpush.msra.mxu0 0.0
    %128 = vmatpush.msra.mxu0 0.0
    %129 = vmatpush.msra.mxu0 0.0
    %130 = vmatpush.msra.mxu0 0.0
    %131 = vmatpush.msra.mxu0 0.0
    %132 = vmatpush.msra.mxu0 0.0
    %133 = vmatpush.msra.mxu0 0.0
    %134 = vmatpush.msra.mxu0 %v67
    %135 = vmatpush.msra.mxu0 %v66
    %136 = vmatmul.f32.gmra.mxu0 %v115
    %v137 = vpop.f32.mrf.mxu0
    %v138 = vadd.f32 %v112, %v137
    %139 = vmatmul.f32.gmra.mxu0 %v118
    %v140 = vpop.f32.mrf.mxu0
    %v141 = vadd.f32 %v113, %v140
    %142 = vdwg.mxu0
    %vm143 = vcmask 261120
    %v144 = vsel %vm143, %v138, 0.0
    %145 = vadd.xlane.f32.xlu0 %v144
    %v146 = vpop.xlane.xlu0 %145
    %v147 = vsel %vm143, %v141, 0.0
    %148 = vadd.xlane.f32.xlu0 %v147
    %v149 = vpop.xlane.xlu0 %148
    %v150 = vadd.f32 %v146, %v149
    %v151 = vmul.f32 %v150, 0.015625
    %153 = vset.pattern.permute.xlu0 0
    %154 = vperm.xlu0 %153, %v151
    %v155 = vpop.permute.xlu0 %154
    %v157 = vsub.f32 %v138, %v155
    %v158 = vsub.f32 %v141, %v155
    %v159 = vmul.f32 %v157, %v157
    %v160 = vmul.f32 %v158, %v158
    %v161 = vsel %vm143, %v159, 0.0
    %162 = vadd.xlane.f32.xlu0 %v161
    %v163 = vpop.xlane.xlu0 %162
    %v164 = vsel %vm143, %v160, 0.0
    %165 = vadd.xlane.f32.xlu0 %v164
    %v166 = vpop.xlane.xlu0 %165
    %v167 = vadd.f32 %v163, %v166
    %v168 = vmul.f32 %v167, 0.015625
    %v169 = vadd.f32 %v168, 1e-05
    %v170 = vrsqrt.pop %v169
    %v171 = vmul.f32 %v170, %v169
    %v172 = vmul.f32 %v171, %v170
    %v173 = vmul.f32 0.5, %v172
    %v174 = vsub.f32 1.5, %v173
    %v175 = vmul.f32 %v170, %v174
    %vm176 = vweird.f32 %v169
    %vm177 = vweird.f32 %v170
    %vm178 = vmor %vm176, %vm177
    %v179 = vsel %vm178, %v170, %v175
    %181 = vset.pattern.permute.xlu0 0
    %182 = vperm.xlu0 %181, %v179
    %v183 = vpop.permute.xlu0 %182
    %v185 = vmul.f32 %v157, %v183
    %v186 = vmul.f32 %v158, %v183
    %v187 = vld [vmem:[%s5] sm:$0xff]
    %v188 = vld [vmem:[%s5 + $0x8] sm:$0xff]
    %190 = vset.pattern.permute.xlu0 0
    %191 = vperm.xlu0 %190, %v187
    %v192 = vpop.permute.xlu0 %191
    %195 = vset.pattern.permute.xlu0 0
    %196 = vperm.xlu0 %195, %v188
    %v197 = vpop.permute.xlu0 %196
    %v199 = vmul.f32 %v185, %v192
    %v200 = vmul.f32 %v186, %v197
    %v201 = vld [vmem:[%s6] sm:$0xff]
    %v202 = vld [vmem:[%s6 + $0x8] sm:$0xff]
    %204 = vset.pattern.permute.xlu0 0
    %205 = vperm.xlu0 %204, %v201
    %v206 = vpop.permute.xlu0 %205
    %209 = vset.pattern.permute.xlu0 0
    %210 = vperm.xlu0 %209, %v202
    %v211 = vpop.permute.xlu0 %210
    %v213 = vadd.f32 %v199, %v206
    %v214 = vadd.f32 %v200, %v211
    %v215 = vmax.f32 %v213, 0.0
    %v216 = vmax.f32 %v214, 0.0
    %v217 = vld [vmem:[%s7] sm:$0xff]
    %v218 = vld [vmem:[%s7 + $0x8] sm:$0xff]
    %v219 = vld [vmem:[%s7 + $0x10] sm:$0xff]
    %v220 = vld [vmem:[%s7 + $0x18] sm:$0xff]
    %221 = vmatpush.msra.mxu0 0.0
    %222 = vmatpush.msra.mxu0 0.0
    %223 = vmatpush.msra.mxu0 0.0
    %224 = vmatpush.msra.mxu0 0.0
    %225 = vmatpush.msra.mxu0 0.0
    %226 = vmatpush.msra.mxu0 0.0
    %227 = vmatpush.msra.mxu0 0.0
    %228 = vmatpush.msra.mxu0 0.0
    %229 = vmatpush.msra.mxu0 0.0
    %230 = vmatpush.msra.mxu0 0.0
    %231 = vmatpush.msra.mxu0 0.0
    %232 = vmatpush.msra.mxu0 0.0
    %233 = vmatpush.msra.mxu0 0.0
    %234 = vmatpush.msra.mxu0 0.0
    %235 = vmatpush.msra.mxu0 %v216
    %236 = vmatpush.msra.mxu0 %v215
    %237 = vmatmul.f32.gmra.mxu0 %v70
    %v238 = vpop.f32.mrf.mxu0
    %v239 = vadd.f32 0.0, %v238
    %240 = vmatmul.f32.gmra.mxu0 %v73
    %v241 = vpop.f32.mrf.mxu0
    %v242 = vadd.f32 0.0, %v241
    %243 = vdwg.mxu0
    %v244 = vld [vmem:[%s8] sm:$0x1]
    %v246 = vperm.slane %v244, 0
    %v248 = vmul.f32 %v102, %v246
    %v249 = vmul.f32 %v107, %v246
    %v251 = vsel %vm143, %v239, 0
    %v254 = vsel %vm143, %v242, 0
    %256 = vmatpush.msra.mxu0 0.0
    %257 = vmatpush.msra.mxu0 0.0
    %258 = vmatpush.msra.mxu0 0.0
    %259 = vmatpush.msra.mxu0 0.0
    %260 = vmatpush.msra.mxu0 0.0
    %261 = vmatpush.msra.mxu0 0.0
    %262 = vmatpush.msra.mxu0 0.0
    %263 = vmatpush.msra.mxu0 0.0
    %264 = vmatpush.msra.mxu0 0.0
    %265 = vmatpush.msra.mxu0 0.0
    %266 = vmatpush.msra.mxu0 0.0
    %267 = vmatpush.msra.mxu0 0.0
    %268 = vmatpush.msra.mxu0 %v220
    %269 = vmatpush.msra.mxu0 %v219
    %270 = vmatpush.msra.mxu0 %v218
    %271 = vmatpush.msra.mxu0 %v217
    %272 = vmatmul.f32.gmra.mxu0 %v251
    %v273 = vpop.f32.mrf.mxu0
    %v274 = vadd.f32 %v248, %v273
    %275 = vmatmul.f32.gmra.mxu0 %v254
    %v276 = vpop.f32.mrf.mxu0
    %v277 = vadd.f32 %v249, %v276
    %278 = vdwg.mxu0
    %v279 = vsel %vm143, %v274, 0.0
    %280 = vadd.xlane.f32.xlu0 %v279
    %v281 = vpop.xlane.xlu0 %280
    %v282 = vsel %vm143, %v277, 0.0
    %283 = vadd.xlane.f32.xlu0 %v282
    %v284 = vpop.xlane.xlu0 %283
    %v285 = vadd.f32 %v281, %v284
    %v286 = vmul.f32 %v285, 0.015625
    %288 = vset.pattern.permute.xlu0 0
    %289 = vperm.xlu0 %288, %v286
    %v290 = vpop.permute.xlu0 %289
    %v292 = vsub.f32 %v274, %v290
    %v293 = vsub.f32 %v277, %v290
    %v294 = vmul.f32 %v292, %v292
    %v295 = vmul.f32 %v293, %v293
    %v296 = vsel %vm143, %v294, 0.0
    %297 = vadd.xlane.f32.xlu0 %v296
    %v298 = vpop.xlane.xlu0 %297
    %v299 = vsel %vm143, %v295, 0.0
    %300 = vadd.xlane.f32.xlu0 %v299
    %v301 = vpop.xlane.xlu0 %300
    %v302 = vadd.f32 %v298, %v301
    %v303 = vmul.f32 %v302, 0.015625
    %v304 = vadd.f32 %v303, 1e-05
    %v305 = vrsqrt.pop %v304
    %v306 = vmul.f32 %v305, %v304
    %v307 = vmul.f32 %v306, %v305
    %v308 = vmul.f32 0.5, %v307
    %v309 = vsub.f32 1.5, %v308
    %v310 = vmul.f32 %v305, %v309
    %vm311 = vweird.f32 %v304
    %vm312 = vweird.f32 %v305
    %vm313 = vmor %vm311, %vm312
    %v314 = vsel %vm313, %v305, %v310
    %316 = vset.pattern.permute.xlu0 0
    %317 = vperm.xlu0 %316, %v314
    %v318 = vpop.permute.xlu0 %317
    %v320 = vmul.f32 %v292, %v318
    %v321 = vmul.f32 %v293, %v318
    %v322 = vld [vmem:[%s9] sm:$0xff]
    %v323 = vld [vmem:[%s9 + $0x8] sm:$0xff]
    %325 = vset.pattern.permute.xlu0 0
    %326 = vperm.xlu0 %325, %v322
    %v327 = vpop.permute.xlu0 %326
    %330 = vset.pattern.permute.xlu0 0
    %331 = vperm.xlu0 %330, %v323
    %v332 = vpop.permute.xlu0 %331
    %v334 = vmul.f32 %v320, %v327
    %v335 = vmul.f32 %v321, %v332
    %v336 = vld [vmem:[%s10] sm:$0xff]
    %v337 = vld [vmem:[%s10 + $0x8] sm:$0xff]
    %339 = vset.pattern.permute.xlu0 0
    %340 = vperm.xlu0 %339, %v336
    %v341 = vpop.permute.xlu0 %340
    %344 = vset.pattern.permute.xlu0 0
    %345 = vperm.xlu0 %344, %v337
    %v346 = vpop.permute.xlu0 %345
    %v348 = vadd.f32 %v334, %v341
    %v349 = vadd.f32 %v335, %v346
    %v350 = vmax.f32 %v348, 0.0
    %v351 = vmax.f32 %v349, 0.0
    %v352 = vld [vmem:[%s11] sm:$0xff]
    %v353 = vld [vmem:[%s11 + $0x8] sm:$0xff]
    %v354 = vld [vmem:[%s11 + $0x10] sm:$0xff]
    %v355 = vld [vmem:[%s11 + $0x18] sm:$0xff]
    %356 = vmatpush.msra.mxu0 0.0
    %357 = vmatpush.msra.mxu0 0.0
    %358 = vmatpush.msra.mxu0 0.0
    %359 = vmatpush.msra.mxu0 0.0
    %360 = vmatpush.msra.mxu0 0.0
    %361 = vmatpush.msra.mxu0 0.0
    %362 = vmatpush.msra.mxu0 0.0
    %363 = vmatpush.msra.mxu0 0.0
    %364 = vmatpush.msra.mxu0 0.0
    %365 = vmatpush.msra.mxu0 0.0
    %366 = vmatpush.msra.mxu0 0.0
    %367 = vmatpush.msra.mxu0 0.0
    %368 = vmatpush.msra.mxu0 0.0
    %369 = vmatpush.msra.mxu0 0.0
    %370 = vmatpush.msra.mxu0 %v351
    %371 = vmatpush.msra.mxu0 %v350
    %372 = vmatmul.f32.gmra.mxu0 %v70
    %v373 = vpop.f32.mrf.mxu0
    %v374 = vadd.f32 0.0, %v373
    %375 = vmatmul.f32.gmra.mxu0 %v73
    %v376 = vpop.f32.mrf.mxu0
    %v377 = vadd.f32 0.0, %v376
    %378 = vdwg.mxu0
    %v379 = vld [vmem:[%s12] sm:$0x1]
    %v381 = vperm.slane %v379, 0
    %v383 = vmul.f32 %v102, %v381
    %v384 = vmul.f32 %v107, %v381
    %v386 = vsel %vm143, %v374, 0
    %v389 = vsel %vm143, %v377, 0
    %391 = vmatpush.msra.mxu0 0.0
    %392 = vmatpush.msra.mxu0 0.0
    %393 = vmatpush.msra.mxu0 0.0
    %394 = vmatpush.msra.mxu0 0.0
    %395 = vmatpush.msra.mxu0 0.0
    %396 = vmatpush.msra.mxu0 0.0
    %397 = vmatpush.msra.mxu0 0.0
    %398 = vmatpush.msra.mxu0 0.0
    %399 = vmatpush.msra.mxu0 0.0
    %400 = vmatpush.msra.mxu0 0.0
    %401 = vmatpush.msra.mxu0 0.0
    %402 = vmatpush.msra.mxu0 0.0
    %403 = vmatpush.msra.mxu0 %v355
    %404 = vmatpush.msra.mxu0 %v354
    %405 = vmatpush.msra.mxu0 %v353
    %406 = vmatpush.msra.mxu0 %v352
    %407 = vmatmul.f32.gmra.mxu0 %v386
    %v408 = vpop.f32.mrf.mxu0
    %v409 = vadd.f32 %v383, %v408
    %410 = vmatmul.f32.gmra.mxu0 %v389
    %v411 = vpop.f32.mrf.mxu0
    %v412 = vadd.f32 %v384, %v411
    %413 = vdwg.mxu0
    %v414 = vsel %vm143, %v409, 0.0
    %415 = vadd.xlane.f32.xlu0 %v414
    %v416 = vpop.xlane.xlu0 %415
    %v417 = vsel %vm143, %v412, 0.0
    %418 = vadd.xlane.f32.xlu0 %v417
    %v419 = vpop.xlane.xlu0 %418
    %v420 = vadd.f32 %v416, %v419
    %v421 = vmul.f32 %v420, 0.015625
    %423 = vset.pattern.permute.xlu0 0
    %424 = vperm.xlu0 %423, %v421
    %v425 = vpop.permute.xlu0 %424
    %v427 = vsub.f32 %v409, %v425
    %v428 = vsub.f32 %v412, %v425
    %v429 = vmul.f32 %v427, %v427
    %v430 = vmul.f32 %v428, %v428
    %v431 = vsel %vm143, %v429, 0.0
    %432 = vadd.xlane.f32.xlu0 %v431
    %v433 = vpop.xlane.xlu0 %432
    %v434 = vsel %vm143, %v430, 0.0
    %435 = vadd.xlane.f32.xlu0 %v434
    %v436 = vpop.xlane.xlu0 %435
    %v437 = vadd.f32 %v433, %v436
    %v438 = vmul.f32 %v437, 0.015625
    %v439 = vadd.f32 %v438, 1e-05
    %v440 = vrsqrt.pop %v439
    %v441 = vmul.f32 %v440, %v439
    %v442 = vmul.f32 %v441, %v440
    %v443 = vmul.f32 0.5, %v442
    %v444 = vsub.f32 1.5, %v443
    %v445 = vmul.f32 %v440, %v444
    %vm446 = vweird.f32 %v439
    %vm447 = vweird.f32 %v440
    %vm448 = vmor %vm446, %vm447
    %v449 = vsel %vm448, %v440, %v445
    %451 = vset.pattern.permute.xlu0 0
    %452 = vperm.xlu0 %451, %v449
    %v453 = vpop.permute.xlu0 %452
    %v455 = vmul.f32 %v427, %v453
    %v456 = vmul.f32 %v428, %v453
    %v457 = vld [vmem:[%s13] sm:$0xff]
    %v458 = vld [vmem:[%s13 + $0x8] sm:$0xff]
    %460 = vset.pattern.permute.xlu0 0
    %461 = vperm.xlu0 %460, %v457
    %v462 = vpop.permute.xlu0 %461
    %465 = vset.pattern.permute.xlu0 0
    %466 = vperm.xlu0 %465, %v458
    %v467 = vpop.permute.xlu0 %466
    %v469 = vmul.f32 %v455, %v462
    %v470 = vmul.f32 %v456, %v467
    %v471 = vld [vmem:[%s14] sm:$0xff]
    %v472 = vld [vmem:[%s14 + $0x8] sm:$0xff]
    %474 = vset.pattern.permute.xlu0 0
    %475 = vperm.xlu0 %474, %v471
    %v476 = vpop.permute.xlu0 %475
    %479 = vset.pattern.permute.xlu0 0
    %480 = vperm.xlu0 %479, %v472
    %v481 = vpop.permute.xlu0 %480
    %v483 = vadd.f32 %v469, %v476
    %v484 = vadd.f32 %v470, %v481
    %v485 = vld [vmem:[%s15] sm:$0xff]
    %v486 = vld [vmem:[%s15 + $0x8] sm:$0xff]
    %v488 = vsel %vm68, %v60, 0
    %v491 = vsel %vm68, %v61, 0
    %493 = vmatpush.msra.mxu0 0.0
    %494 = vmatpush.msra.mxu0 0.0
    %495 = vmatpush.msra.mxu0 0.0
    %496 = vmatpush.msra.mxu0 0.0
    %497 = vmatpush.msra.mxu0 0.0
    %498 = vmatpush.msra.mxu0 0.0
    %499 = vmatpush.msra.mxu0 0.0
    %500 = vmatpush.msra.mxu0 0.0
    %501 = vmatpush.msra.mxu0 0.0
    %502 = vmatpush.msra.mxu0 0.0
    %503 = vmatpush.msra.mxu0 0.0
    %504 = vmatpush.msra.mxu0 0.0
    %505 = vmatpush.msra.mxu0 0.0
    %506 = vmatpush.msra.mxu0 0.0
    %507 = vmatpush.msra.mxu0 %v486
    %508 = vmatpush.msra.mxu0 %v485
    %509 = vmatmul.f32.gmra.mxu0 %v488
    %v510 = vpop.f32.mrf.mxu0
    %v511 = vadd.f32 0.0, %v510
    %512 = vmatmul.f32.gmra.mxu0 %v491
    %v513 = vpop.f32.mrf.mxu0
    %v514 = vadd.f32 0.0, %v513
    %515 = vdwg.mxu0
    %518 = vrot.lane.b32.xlu0 %v483, 32
    %v519 = vpop.permute.xlu0 %518
    %520 = vrot.lane.b32.xlu0 %v484, 32
    %v521 = vpop.permute.xlu0 %520
    %v524 = vsel %vm143, %v511, %v519
    %v525 = vsel %vm143, %v514, %v521
    %v526 = vld [vmem:[%s16] sm:$0xff]
    %v527 = vld [vmem:[%s16 + $0x8] sm:$0xff]
    %v528 = vld [vmem:[%s16 + $0x10] sm:$0xff]
    %v529 = vld [vmem:[%s16 + $0x18] sm:$0xff]
    %v530 = vld [vmem:[%s16 + $0x20] sm:$0xff]
    %v531 = vld [vmem:[%s16 + $0x28] sm:$0xff]
    %v532 = vld [vmem:[%s16 + $0x30] sm:$0xff]
    %v533 = vld [vmem:[%s16 + $0x38] sm:$0xff]
    %v534 = vld [vmem:[%s17] sm:$0x1]
    %v536 = vperm.slane %v534, 0
    %vm538 = vcmask 523264
    %v540 = vsel %vm538, %v524, 0
    %v543 = vsel %vm538, %v525, 0
    %545 = vmatpush.msra.mxu0 0.0
    %546 = vmatpush.msra.mxu0 0.0
    %547 = vmatpush.msra.mxu0 0.0
    %548 = vmatpush.msra.mxu0 0.0
    %549 = vmatpush.msra.mxu0 0.0
    %550 = vmatpush.msra.mxu0 0.0
    %551 = vmatpush.msra.mxu0 0.0
    %552 = vmatpush.msra.mxu0 0.0
    %553 = vmatpush.msra.mxu0 %v533
    %554 = vmatpush.msra.mxu0 %v532
    %555 = vmatpush.msra.mxu0 %v531
    %556 = vmatpush.msra.mxu0 %v530
    %557 = vmatpush.msra.mxu0 %v529
    %558 = vmatpush.msra.mxu0 %v528
    %559 = vmatpush.msra.mxu0 %v527
    %560 = vmatpush.msra.mxu0 %v526
    %561 = vmatmul.f32.gmra.mxu0 %v540
    %v562 = vpop.f32.mrf.mxu0
    %v563 = vadd.f32 %v536, %v562
    %564 = vmatmul.f32.gmra.mxu0 %v543
    %v565 = vpop.f32.mrf.mxu0
    %v566 = vadd.f32 %v536, %v565
    %567 = vdwg.mxu0
    %v568 = vxor.u32 %v563, 2147483648
    %v569 = vxor.u32 %v566, 2147483648
    %v570 = vmul.f32 %v568, 1.442695
    %v571 = vpow.pop %v570
    %v572 = vmul.f32 %v569, 1.442695
    %v573 = vpow.pop %v572
    %v574 = vadd.f32 %v571, 1.0
    %v575 = vadd.f32 %v573, 1.0
    %v576 = vrcp.pop %v574
    %v577 = vmul.f32 %v574, %v576
    %v578 = vsub.f32 1.0, %v577
    %v579 = vmul.f32 %v576, %v578
    %v580 = vadd.f32 %v576, %v579
    %vm581 = vweird.f32 %v574
    %vm582 = vweird.f32 %v576
    %vm583 = vmor %vm581, %vm582
    %v584 = vsel %vm583, %v576, %v580
    %v585 = vand.u32 2147483647, %v574
    %vm586 = vcmp.eq.f32.partialorder %v585, 8.507059e+37
    %v587 = vand.u32 %v574, 2147483648
    %v588 = vor.u32 1.1754944e-38, %v587
    %v589 = vsel %vm586, %v588, %v584
    %v590 = vmul.f32 1.0, %v589
    %v591 = vrcp.pop %v575
    %v592 = vmul.f32 %v575, %v591
    %v593 = vsub.f32 1.0, %v592
    %v594 = vmul.f32 %v591, %v593
    %v595 = vadd.f32 %v591, %v594
    %vm596 = vweird.f32 %v575
    %vm597 = vweird.f32 %v591
    %vm598 = vmor %vm596, %vm597
    %v599 = vsel %vm598, %v591, %v595
    %v600 = vand.u32 2147483647, %v575
    %vm601 = vcmp.eq.f32.partialorder %v600, 8.507059e+37
    %v602 = vand.u32 %v575, 2147483648
    %v603 = vor.u32 1.1754944e-38, %v602
    %v604 = vsel %vm601, %v603, %v599
    %v605 = vmul.f32 1.0, %v604
    %v606 = vmul.f32 %v590, %v483
    %v607 = vmul.f32 %v605, %v484
    %v608 = vsub.f32 1.0, %v590
    %v609 = vsub.f32 1.0, %v605
    %v610 = vmul.f32 %v608, %v511
    %v611 = vmul.f32 %v609, %v514
    %v612 = vadd.f32 %v606, %v610
    %v613 = vadd.f32 %v607, %v611
    %v614 = vmax.f32 %v612, 0.0
    %v615 = vmax.f32 %v613, 0.0
    %v616 = vsel %vm143, %v614, 0.0
    %v617 = vsel %vm143, %v615, 0.0
    %618 = vst [vmem:[#allocation2] sm:$0xff] %v616
    %619 = vst [vmem:[#allocation2 + $0x8] sm:$0xff] %v617
    // Predicated region
    $region74: #{tpu_custom_call.1} parent=1 // pred_check
      _
    $region75: #{tpu_custom_call.1} parent=1 // pred_check_branch
      %621 = sbr.rel (0) target = $region77
    $region76: #{tpu_custom_call.1} parent=1 // pred_region
      %623 = vsyncadd [#allocation3], 0
      %s624 = sshll.u32 [#allocation2], 4
      %s625 = int_to_ptr.vmem [resolvable:$true] %s624
      %s626 = sshll.u32 %s18, 4
      %s627 = int_to_ptr.hbm [resolvable:$true] %s626
      %632 = dma.vmem_to_hbm [thread:$0]  %s625, 256, %s627, [#allocation3], 128, 128, 8
    $region77: #{tpu_custom_call.1} parent=1 // pred_fallthru
      _
    // Predicated region
    $region78: #{tpu_custom_call.1} parent=1 // pred_check
      _
    $region79: #{tpu_custom_call.1} parent=1 // pred_check_branch
      %634 = sbr.rel (0) target = $region81
    $region80: #{tpu_custom_call.1} parent=1 // pred_region
      %636 = dma.done [#allocation3], 256
    $region81: #{tpu_custom_call.1} parent=1 // pred_fallthru
      _
    %637 = vsyncpa [#allocation3], 1

</llo_original>
